<compile_context>
chip_gen: v7x
topology: tpu7x:2x2x1
jax: 0.10.0
libtpu: 0.0.40
codegen_flags: <defaults>
</compile_context>

<pallas_src>
import jax
import jax.numpy as jnp
from jax.experimental import pallas as pl
from jax.experimental.pallas import tpu as pltpu

_MAX_TILE_N = 8192  # lane-dense batch tile (f32 x block = 32*8192*4 B = 1 MiB)


def _perceptron_kernel(b_ref, w_ref, x_ref, o_ref):
    """b_ref: SMEM (1,) f32; w_ref: (D,1) f32; x_ref: (D,TILE_N) f32; o_ref: (1,TILE_N) f32."""
    # Lane-broadcast multiply (VPU) + sublane reduction (XLU), then scalar bias
    # add from SMEM.  Output row is lane-dense (multiple of 128 lanes).
    s = jnp.sum(w_ref[...] * x_ref[...], axis=0, keepdims=True)  # (1, TILE_N)
    o_ref[...] = s + b_ref[0]


def _round_up(v, m):
    return ((v + m - 1) // m) * m


def perceptron_forward(w, x, b=0.0):
    """Pallas equivalent of PerceptronLiHangBook.forward: matmul(w, x) + b.

    w: (D,) f32
    x: (D,) f32  -> f32 scalar   (plain XLA dot; no kernel launch)
       (D,N) f32 -> (N,) f32     (Pallas, batch tiled on the lane axis)
    b: python float / 0-d array (routed through SMEM, not baked into the binary)
    """
    w = jnp.asarray(w, jnp.float32)
    x = jnp.asarray(x, jnp.float32)
    assert w.ndim == 1

    if x.ndim == 1:
        # Single sample: a kernel launch + padding would cost far more than the
        # work itself -- just use the XLA dot.
        assert x.shape[0] == w.shape[0]
        return jnp.dot(w, x) + jnp.float32(b)

    D, N = x.shape
    assert w.shape[0] == D

    # Lane-dense tile, multiple of 128; no wrapper-side padding of x -- the
    # cdiv grid lets Pallas mask the (possibly partial) tail block.
    tile_n = min(_MAX_TILE_N, _round_up(N, 128))
    grid = (pl.cdiv(N, tile_n),)

    w2 = w[:, None]                                # (D, 1) weight column
    b2 = jnp.full((1,), b, dtype=jnp.float32)      # SMEM scalar bias

    out = pl.pallas_call(
        _perceptron_kernel,
        out_shape=jax.ShapeDtypeStruct((1, N), jnp.float32),
        grid=grid,
        in_specs=[
            pl.BlockSpec(memory_space=pltpu.MemorySpace.SMEM),    # bias (whole array)
            pl.BlockSpec((D, 1), lambda j: (0, 0)),               # w: same block every step
            pl.BlockSpec((D, tile_n), lambda j: (0, j)),          # x: batch tile j
        ],
        out_specs=pl.BlockSpec((1, tile_n), lambda j: (0, j)),
        compiler_params=pltpu.CompilerParams(
            dimension_semantics=("parallel",)),                   # batch axis -> 2 TCs on v7x
    )(b2, w2, x)

    return out[0]


if __name__ == "__main__":
    D, N = 32, 256
    key = jax.random.PRNGKey(0)
    kw, kx = jax.random.split(key)
    w = jax.random.normal(kw, (D,), dtype=jnp.float32)
    x_batch = jax.random.normal(kx, (D, N), dtype=jnp.float32)
    b = 0.5

    # Batched forward: lane-tiled grid over N, no wrapper-side pad of x.
    y = jax.block_until_ready(perceptron_forward(w, x_batch, b))
    ref = jnp.matmul(w, x_batch) + b
    assert y.shape == (N,)
    assert jnp.allclose(y, ref, rtol=1e-5, atol=1e-5), float(jnp.max(jnp.abs(y - ref)))

    # Non-128-multiple batch: exercises the masked partial tail block.
    N2 = 200
    x2 = x_batch[:, :N2]
    y2 = jax.block_until_ready(perceptron_forward(w, x2, b))
    ref2 = jnp.matmul(w, x2) + b
    assert y2.shape == (N2,)
    assert jnp.allclose(y2, ref2, rtol=1e-5, atol=1e-5), float(jnp.max(jnp.abs(y2 - ref2)))

    # Single-sample path: matmul(w, x_vec) + b -> scalar (plain XLA dot).
    x_vec = x_batch[:, 0]
    y0 = jax.block_until_ready(perceptron_forward(w, x_vec, b))
    ref0 = float(jnp.sum(w * x_vec) + b)
    assert abs(float(y0) - ref0) < 1e-4, (float(y0), ref0)

    print("KERNEL_OK")
</pallas_src>

<mosaic_0001>
module attributes {stable_mosaic.version = 11 : i64} {
  func.func @_perceptron_kernel(%arg0: i32, %arg1: memref<1xf32, #tpu.memory_space<smem>>, %arg2: memref<32x1xf32, #tpu.memory_space<vmem>>, %arg3: memref<32x256xf32, #tpu.memory_space<vmem>>, %arg4: memref<1x256xf32, #tpu.memory_space<vmem>>) attributes {dimension_semantics = [#tpu.dimension_semantics<parallel>], iteration_bounds = array<i64: 1>, scalar_prefetch = 0 : i64, scratch_operands = 0 : i64, tpu.core_type = #tpu.core_type<tc>, window_params = [{transform_indices = @transform_0, window_bounds = array<i64: 1>}, {pipeline_mode = #tpu.pipeline_mode<synchronous>, transform_indices = @transform_1, window_bounds = array<i64: 32, 1>}, {transform_indices = @transform_2, window_bounds = array<i64: 32, 256>}, {transform_indices = @transform_3, window_bounds = array<i64: 1, 256>}]} {
    %c0 = arith.constant 0 : index
    %c0_0 = arith.constant 0 : index
    %0 = vector.load %arg2[%c0, %c0_0] : memref<32x1xf32, #tpu.memory_space<vmem>>, vector<32x1xf32>
    %c0_1 = arith.constant 0 : index
    %c0_2 = arith.constant 0 : index
    %1 = vector.load %arg3[%c0_1, %c0_2] : memref<32x256xf32, #tpu.memory_space<vmem>>, vector<32x256xf32>
    %2 = vector.broadcast %0 : vector<32x1xf32> to vector<32x256xf32>
    %3 = arith.mulf %2, %1 : vector<32x256xf32>
    %cst = arith.constant dense<0.000000e+00> : vector<256xf32>
    %4 = vector.multi_reduction <add>, %3, %cst [0] : vector<32x256xf32> to vector<256xf32>
    %5 = vector.shape_cast %4 : vector<256xf32> to vector<1x256xf32>
    %c0_3 = arith.constant 0 : index
    %6 = memref.load %arg1[%c0_3] : memref<1xf32, #tpu.memory_space<smem>>
    %7 = vector.broadcast %6 : f32 to vector<1x256xf32>
    %8 = arith.addf %5, %7 : vector<1x256xf32>
    %c0_4 = arith.constant 0 : index
    %c0_5 = arith.constant 0 : index
    %9 = vector.load %arg4[%c0_4, %c0_5] : memref<1x256xf32, #tpu.memory_space<vmem>>, vector<1x256xf32>
    tpu.vector_store %arg4[%c0_4, %c0_5], %8 {strides = array<i32>} : memref<1x256xf32, #tpu.memory_space<vmem>>, vector<1x256xf32>,
    return
  }
  func.func @transform_0(%arg0: i32) -> i32 {
    %c0_i32 = arith.constant 0 : i32
    %c0_i32_0 = arith.constant 0 : i32
    return %c0_i32 : i32
  }
  func.func @transform_1(%arg0: i32) -> (i32, i32) {
    %c0_i32 = arith.constant 0 : i32
    %c0_i32_0 = arith.constant 0 : i32
    %c0_i32_1 = arith.constant 0 : i32
    return %c0_i32, %c0_i32_0 : i32, i32
  }
  func.func @transform_2(%arg0: i32) -> (i32, i32) {
    %c0_i32 = arith.constant 0 : i32
    %c0_i32_0 = arith.constant 0 : i32
    return %c0_i32, %arg0 : i32, i32
  }
  func.func @transform_3(%arg0: i32) -> (i32, i32) {
    %c0_i32 = arith.constant 0 : i32
    %c0_i32_0 = arith.constant 0 : i32
    return %c0_i32, %arg0 : i32, i32
  }
}

</mosaic_0001>

<llo_original>
// kernel: tpu_custom_call.1
$region0: #{tpu_custom_call.1}
  #allocation0 [shape = 'u32[]', space=smem, size = 0x4, offset = 0x4, fixed_abs, tag = 'smem constant byte address 0x4 - core index']
  #allocation1 [shape = 'u32[144,128]{1,0:T(1,128)}', space=vmem, size = 0x12000, scoped, tag = 'internal scratch']
  #allocation2 [shape = 'f32[1]{0:T(128)S(6)}', space=smem, size = 0x200, scoped, tag = 'scoped memory for tpu_custom_call.1']
  %s0 = inlined_call_operand.<no memory space> [shape: f32[1], index: 0, kind: input, shape index: {}]
  %s1 = inlined_call_operand.vmem [shape: f32[32,1], index: 1, kind: input, shape index: {}]
  %s2 = inlined_call_operand.hbm [shape: f32[32,256], index: 2, kind: input, shape index: {}]
  %s3 = inlined_call_operand.hbm [shape: f32[1,256], index: 3, kind: output, shape index: {}]
  %s4 = sld [smem:[#allocation0]]
  $region26: #{tpu_custom_call.1} parent=0
    _
  %s6 = ssub.s32 1, %s4
  %s7 = scalar_select 0, %s6, %s4
  %8 = sst [smem:[#allocation2]] %s0
  $region1: #{tpu_custom_call.1} parent=0
    #allocation3 [shape = 'u8[32768]{0}', space=vmem, size = 0x8000, scoped, tag = 'input window, operand 2, single buffered']
    #allocation4 [shape = 's32[1]{0}', space=sflag, size = 0x4, scoped, tag = 'scoped memory for tpu_custom_call.1']
    #allocation5 [shape = 's32[1]{0}', space=sflag, size = 0x4, scoped, tag = 'scoped memory for tpu_custom_call.1']
    #allocation6 [shape = 'u8[1024]{0}', space=vmem, size = 0x400, scoped, tag = 'output window, operand 0, single buffered']
    %9 = vsyncpa [#allocation4], 0
    %10 = vsyncpa [#allocation5], 0
    // Predicated region
    $region2: #{tpu_custom_call.1} parent=1 // pred_check
      _
    $region3: #{tpu_custom_call.1} parent=1 // pred_check_branch
      %12 = sbr.rel (0) target = $region5
    $region4: #{tpu_custom_call.1} parent=1 // pred_region
      _
    $region5: #{tpu_custom_call.1} parent=1 // pred_fallthru
      _
    // Predicated region
    $region6: #{tpu_custom_call.1} parent=1 // pred_check
      _
    $region7: #{tpu_custom_call.1} parent=1 // pred_check_branch
      %14 = sbr.rel (0) target = $region9
    $region8: #{tpu_custom_call.1} parent=1 // pred_region
      _
    $region9: #{tpu_custom_call.1} parent=1 // pred_fallthru
      _
    // Predicated region
    $region10: #{tpu_custom_call.1} parent=1 // pred_check
      _
    $region11: #{tpu_custom_call.1} parent=1 // pred_check_branch
      %16 = sbr.rel (0) target = $region13
    $region12: #{tpu_custom_call.1} parent=1 // pred_region
      %s18 = ssub.s32 1024, 1024
      %19 = vsyncadd [#allocation4], %s18
      %s20 = sshll.u32 [#allocation3], 4
      %s21 = int_to_ptr.vmem [resolvable:$true] %s20
      %26 = dma.hbm_to_vmem [thread:$0]  %s2, 1024, %s21, [#allocation4], 256, 256, 16
    $region13: #{tpu_custom_call.1} parent=1 // pred_fallthru
      _
    // Predicated region
    $region14: #{tpu_custom_call.1} parent=1 // pred_check
      _
    $region15: #{tpu_custom_call.1} parent=1 // pred_check_branch
      %28 = sbr.rel (0) target = $region17
    $region16: #{tpu_custom_call.1} parent=1 // pred_region
      %29 = dma.done [#allocation4], 1024
    $region17: #{tpu_custom_call.1} parent=1 // pred_fallthru
      _
    %v30 = vld [vmem:[%s1] sm:$0xff]
    %v31 = vld [vmem:[%s1 + $0x8] sm:$0xff]
    %v32 = vld [vmem:[%s1 + $0x10] sm:$0xff]
    %v33 = vld [vmem:[%s1 + $0x18] sm:$0xff]
    %v34 = vld [vmem:[#allocation3] sm:$0xff]
    %v35 = vld [vmem:[#allocation3 + $0x8] sm:$0xff]
    %v36 = vld [vmem:[#allocation3 + $0x10] sm:$0xff]
    %v37 = vld [vmem:[#allocation3 + $0x18] sm:$0xff]
    %v38 = vld [vmem:[#allocation3 + $0x20] sm:$0xff]
    %v39 = vld [vmem:[#allocation3 + $0x28] sm:$0xff]
    %v40 = vld [vmem:[#allocation3 + $0x30] sm:$0xff]
    %v41 = vld [vmem:[#allocation3 + $0x38] sm:$0xff]
    %43 = vset.pattern.permute.xlu0 0
    %44 = vperm.xlu0 %43, %v30
    %v45 = vpop.permute.xlu0 %44
    %48 = vset.pattern.permute.xlu0 0
    %49 = vperm.xlu0 %48, %v31
    %v50 = vpop.permute.xlu0 %49
    %53 = vset.pattern.permute.xlu0 0
    %54 = vperm.xlu0 %53, %v32
    %v55 = vpop.permute.xlu0 %54
    %58 = vset.pattern.permute.xlu0 0
    %59 = vperm.xlu0 %58, %v33
    %v60 = vpop.permute.xlu0 %59
    %v62 = vmul.f32 %v45, %v34
    %v63 = vmul.f32 %v45, %v35
    %v64 = vmul.f32 %v50, %v36
    %v65 = vmul.f32 %v50, %v37
    %v66 = vmul.f32 %v55, %v38
    %v67 = vmul.f32 %v55, %v39
    %v68 = vmul.f32 %v60, %v40
    %v69 = vmul.f32 %v60, %v41
    %v70 = vadd.f32 %v62, %v64
    %v71 = vadd.f32 %v70, %v66
    %v72 = vadd.f32 %v71, %v68
    %v73 = vrot.slane %v72, 4
    %v74 = vadd.f32 %v72, %v73
    %v75 = vrot.slane %v74, 2
    %v76 = vadd.f32 %v74, %v75
    %v77 = vrot.slane %v76, 1
    %v78 = vadd.f32 %v76, %v77
    %v79 = vadd.f32 %v63, %v65
    %v80 = vadd.f32 %v79, %v67
    %v81 = vadd.f32 %v80, %v69
    %v82 = vrot.slane %v81, 4
    %v83 = vadd.f32 %v81, %v82
    %v84 = vrot.slane %v83, 2
    %v85 = vadd.f32 %v83, %v84
    %v86 = vrot.slane %v85, 1
    %v87 = vadd.f32 %v85, %v86
    %s88 = sld [smem:[#allocation2]]
    %v89 = vstv %s88
    %v90 = vadd.f32 %v78, %v89
    %v91 = vadd.f32 %v87, %v89
    %v94 = vcombine.low %v90, %v91
    %v96 = vunpack.c.l.s4 1966171168
    %v97 = vunpack.c.0.s8 %v96
    %v98 = vlaneseq
    %v99 = vshrl.u32 %v98, 7
    %v100 = vsub.s32 %v97, %v99
    %v101 = vrot.slane %v94, %v100
    %v103 = vunpack.c.l.s4 1966171168
    %v104 = vunpack.c.0.s8 %v103
    %v105 = vlaneseq
    %v106 = vshrl.u32 %v105, 7
    %v107 = vsub.s32 %v104, %v106
    %v108 = vrot.slane %v101, %v107
    %v110 = vlaneseq
    %vm111 = vcmp.ge.s32.totalorder %v110, 0
    %vm112 = vcmp.lt.s32.totalorder %v110, 256
    %vm113 = vmand %vm111, %vm112
    %114 = vst.msk [vmem:[#allocation6] sm:$0x3] %vm113, %v108
    // Predicated region
    $region18: #{tpu_custom_call.1} parent=1 // pred_check
      _
    $region19: #{tpu_custom_call.1} parent=1 // pred_check_branch
      %116 = sbr.rel (0) target = $region21
    $region20: #{tpu_custom_call.1} parent=1 // pred_region
      %s118 = ssub.s32 32, 32
      %119 = vsyncadd [#allocation5], %s118
      %s121 = sshll.u32 [#allocation6], 4
      %s122 = int_to_ptr.vmem [resolvable:$true] %s121
      %124 = dma.vmem_to_hbm [thread:$0]  %s122, 32, %s3, [#allocation5]
    $region21: #{tpu_custom_call.1} parent=1 // pred_fallthru
      _
    // Predicated region
    $region22: #{tpu_custom_call.1} parent=1 // pred_check
      _
    $region23: #{tpu_custom_call.1} parent=1 // pred_check_branch
      %126 = sbr.rel (0) target = $region25
    $region24: #{tpu_custom_call.1} parent=1 // pred_region
      %127 = dma.done [#allocation5], 32
    $region25: #{tpu_custom_call.1} parent=1 // pred_fallthru
      _
    %128 = vsyncpa [#allocation4], 1
    %129 = vsyncpa [#allocation5], 1

</llo_original>
